<compile_context>
chip_gen: v7x
topology: tpu7x:2x2x1
jax: 0.10.0
libtpu: 0.0.40
codegen_flags: <defaults>
</compile_context>

<pallas_src>
import functools

import jax
import jax.numpy as jnp
from jax import lax
from jax.experimental import pallas as pl
from jax.experimental.pallas import tpu as pltpu


_VMEM_BUDGET_BYTES = 28 * 1024 * 1024   # conservative tile budget, safe on v5e/v6e/v7x
_VMEM_LIMIT_BYTES = 32 * 1024 * 1024    # scoped limit requested for the tiled path
_SMALL_PATH_BYTES = 6 * 1024 * 1024     # below this, take the fused no-grid path


def _gram_nt(f):
    """F @ F.T as a single MXU NT contraction (no explicit transpose)."""
    return lax.dot_general(
        f, f,
        dimension_numbers=(((1,), (1,)), ((), ())),
        preferred_element_type=jnp.float32)


# ---------------- fused small-problem kernel (no grid) ----------------------
def _style_loss_fused_kernel(feat_ref, tgt_ref, g_ref, loss_ref, *, scale):
    g = _gram_nt(feat_ref[...]) * scale                 # G/(a*b*c*d) then *weight
    g_ref[...] = g
    diff = g - tgt_ref[...].astype(jnp.float32)
    m0, m1 = diff.shape
    loss_ref[...] = jnp.sum(diff * diff, axis=(0, 1), keepdims=True) * (1.0 / (m0 * m1))


# ---------------- K-tiled Gram reduction kernel ------------------------------
def _gram_accum_kernel(feat_ref, g_ref, *, scale):
    k = pl.program_id(0)

    @pl.when(k == 0)
    def _():
        g_ref[...] = jnp.zeros_like(g_ref)

    # Accumulate directly into the resident f32 output block (no MxM scratch).
    g_ref[...] += _gram_nt(feat_ref[...])

    @pl.when(k == pl.num_programs(0) - 1)
    def _():
        g_ref[...] = g_ref[...] * scale


# ---------------- MSE epilogue kernel (no grid, tiny) ------------------------
def _mse_kernel(g_ref, tgt_ref, loss_ref):
    diff = g_ref[...] - tgt_ref[...].astype(jnp.float32)
    m0, m1 = diff.shape
    loss_ref[...] = jnp.sum(diff * diff, axis=(0, 1), keepdims=True) * (1.0 / (m0 * m1))


def _pick_tk(m, itemsize):
    """Largest K tile whose double-buffered feature block fits the VMEM budget."""
    resident = 2 * m * m * 4            # f32 Gram output (double-buffer accounting)
    avail = max(_VMEM_BUDGET_BYTES - resident, 2 * m * 128 * itemsize)
    for cand in (2048, 1024, 512, 256, 128):
        if 2 * m * cand * itemsize <= avail:
            return cand
    return 128


def style_loss_forward(x, target, weight, *, tk=None, force_tiled=False):
    """Returns (output, G, loss) matching StyleLoss.forward side effects.

    x      : (N, C, H, W) activations (NCHW, like PyTorch). Any float dtype.
    target : (N*C, N*C)   style target Gram matrix (pre-scaled by `weight`).
    weight : python float style weight.
    """
    n, c, h, w = x.shape
    m = n * c
    k = h * w
    feats = x.reshape(m, k)
    itemsize = jnp.dtype(feats.dtype).itemsize
    scale = float(weight) / float(n * c * h * w)   # G.div(a*b*c*d) then .mul_(weight)

    small = (m * k * itemsize + 3 * m * m * 4) <= _SMALL_PATH_BYTES
    if small and not force_tiled:
        cost = pl.CostEstimate(
            flops=2 * m * m * k + 3 * m * m,
            transcendentals=0,
            bytes_accessed=int(m * k * itemsize + m * m * 4
                               + m * m * jnp.dtype(target.dtype).itemsize + 4))
        g, loss = pl.pallas_call(
            functools.partial(_style_loss_fused_kernel, scale=scale),
            out_shape=(jax.ShapeDtypeStruct((m, m), jnp.float32),
                       jax.ShapeDtypeStruct((1, 1), jnp.float32)),
            cost_estimate=cost,
        )(feats, target)
        return x, g, loss[0, 0]

    # ---------------- K-tiled path ----------------
    if tk is None:
        tk = _pick_tk(m, itemsize)
    k_aligned = ((k + 127) // 128) * 128
    tk = max(128, min(int(tk), k_aligned))
    kp = ((k + tk - 1) // tk) * tk
    if kp != k:
        # Zero columns do not change F @ F.T.
        feats = jnp.pad(feats, ((0, 0), (0, kp - k)))

    grid = (kp // tk,)
    gram_cost = pl.CostEstimate(
        flops=2 * m * m * kp,
        transcendentals=0,
        bytes_accessed=int(m * kp * itemsize + m * m * 4))

    g = pl.pallas_call(
        functools.partial(_gram_accum_kernel, scale=scale),
        out_shape=jax.ShapeDtypeStruct((m, m), jnp.float32),
        grid_spec=pltpu.PrefetchScalarGridSpec(
            num_scalar_prefetch=0,
            grid=grid,
            in_specs=[pl.BlockSpec((m, tk), lambda i: (0, i))],   # streamed K tile
            out_specs=pl.BlockSpec((m, m), lambda i: (0, 0)),     # resident accumulator
        ),
        compiler_params=pltpu.CompilerParams(
            dimension_semantics=("arbitrary",),
            vmem_limit_bytes=_VMEM_LIMIT_BYTES),
        cost_estimate=gram_cost,
    )(feats)

    mse_cost = pl.CostEstimate(
        flops=3 * m * m,
        transcendentals=0,
        bytes_accessed=int(m * m * (4 + jnp.dtype(target.dtype).itemsize) + 4))
    loss = pl.pallas_call(
        _mse_kernel,
        out_shape=jax.ShapeDtypeStruct((1, 1), jnp.float32),
        cost_estimate=mse_cost,
    )(g, target)

    # input.clone(): JAX arrays are immutable, identity is exact.
    return x, g, loss[0, 0]


def _reference(x, target, weight):
    n, c, h, w = x.shape
    feats = x.reshape(n * c, h * w).astype(jnp.float32)
    g = (feats @ feats.T) / (n * c * h * w)
    g = g * weight
    loss = jnp.mean((g - target) ** 2)
    return x, g, loss


def _make_case(key, shape, weight):
    k1, k2 = jax.random.split(key)
    x = jax.random.normal(k1, shape, dtype=jnp.float32)
    style_act = jax.random.normal(k2, shape, dtype=jnp.float32)
    n, c, h, w = shape
    sf = style_act.reshape(n * c, h * w)
    target = (sf @ sf.T) / (n * c * h * w) * weight   # StyleLoss.__init__: target*weight
    return x, target


if __name__ == "__main__":
    key = jax.random.PRNGKey(0)
    k_a, k_b = jax.random.split(key)
    weight = 1000.0

    # Case 1: fused no-grid path (module-consistent small shape).
    x1, t1 = _make_case(k_a, (2, 4, 16, 16), weight)
    out1, g1, loss1 = style_loss_forward(x1, t1, weight)
    jax.block_until_ready((out1, g1, loss1))
    r_out1, r_g1, r_loss1 = _reference(x1, t1, weight)
    assert out1.shape == x1.shape and jnp.allclose(out1, r_out1)
    assert jnp.allclose(g1, r_g1, rtol=1e-5, atol=1e-5)
    assert jnp.allclose(loss1, r_loss1, rtol=1e-5, atol=1e-5)

    # Case 2: force the K-tiled accumulate-into-output path (2 grid steps).
    out2, g2, loss2 = style_loss_forward(x1, t1, weight, tk=128, force_tiled=True)
    jax.block_until_ready((out2, g2, loss2))
    assert jnp.allclose(g2, r_g1, rtol=1e-5, atol=1e-5)
    assert jnp.allclose(loss2, r_loss1, rtol=1e-5, atol=1e-5)

    # Case 3: spatial size not a multiple of 128 (H*W = 196) -> zero-pad path.
    x3, t3 = _make_case(k_b, (2, 4, 14, 14), weight)
    out3, g3, loss3 = style_loss_forward(x3, t3, weight, tk=128, force_tiled=True)
    jax.block_until_ready((out3, g3, loss3))
    r_out3, r_g3, r_loss3 = _reference(x3, t3, weight)
    assert jnp.allclose(g3, r_g3, rtol=1e-5, atol=1e-5)
    assert jnp.allclose(loss3, r_loss3, rtol=1e-5, atol=1e-5)

    print("KERNEL_OK")
</pallas_src>

<mosaic_0001>
module attributes {stable_mosaic.version = 11 : i64} {
  func.func @_style_loss_fused_kernel(%arg0: memref<8x256xf32, #tpu.memory_space<vmem>>, %arg1: memref<8x8xf32, #tpu.memory_space<vmem>>, %arg2: memref<8x8xf32, #tpu.memory_space<vmem>>, %arg3: memref<1x1xf32, #tpu.memory_space<vmem>>) attributes {dimension_semantics = [], scalar_prefetch = 0 : i64, scratch_operands = 0 : i64, tpu.core_type = #tpu.core_type<tc>} {
    %c0 = arith.constant 0 : index
    %c0_0 = arith.constant 0 : index
    %0 = vector.load %arg0[%c0, %c0_0] : memref<8x256xf32, #tpu.memory_space<vmem>>, vector<8x256xf32>
    %cst = arith.constant dense<0.000000e+00> : vector<8x8xf32>
    %1 = tpu.matmul %0, %0, %cst {dimension_numbers = #tpu.dot_dimension_numbers<[1], [1], [0], [0], [0, 0, 1, 0], [], []>} : vector<8x256xf32>, vector<8x256xf32>, vector<8x8xf32> -> vector<8x8xf32>
    %cst_1 = arith.constant 0.48828125 : f32
    %2 = vector.broadcast %cst_1 : f32 to vector<8x8xf32>
    %3 = arith.mulf %1, %2 : vector<8x8xf32>
    %c0_2 = arith.constant 0 : index
    %c0_3 = arith.constant 0 : index
    %4 = vector.load %arg2[%c0_2, %c0_3] : memref<8x8xf32, #tpu.memory_space<vmem>>, vector<8x8xf32>
    tpu.vector_store %arg2[%c0_2, %c0_3], %3 {strides = array<i32>} : memref<8x8xf32, #tpu.memory_space<vmem>>, vector<8x8xf32>,
    %c0_4 = arith.constant 0 : index
    %c0_5 = arith.constant 0 : index
    %5 = vector.load %arg1[%c0_4, %c0_5] : memref<8x8xf32, #tpu.memory_space<vmem>>, vector<8x8xf32>
    %6 = arith.subf %3, %5 : vector<8x8xf32>
    %7 = arith.mulf %6, %6 : vector<8x8xf32>
    %8 = vector.shape_cast %7 : vector<8x8xf32> to vector<1x8x8xf32>
    %cst_6 = arith.constant dense<0.000000e+00> : vector<1xf32>
    %9 = vector.multi_reduction <add>, %8, %cst_6 [1, 2] : vector<1x8x8xf32> to vector<1xf32>
    %10 = vector.shape_cast %9 : vector<1xf32> to vector<1x1x1xf32>
    %11 = vector.extract %10[0, 0, 0] : f32 from vector<1x1x1xf32>
    %12 = vector.broadcast %11 : f32 to vector<1x1xf32>
    %cst_7 = arith.constant 1.562500e-02 : f32
    %13 = vector.broadcast %cst_7 : f32 to vector<1x1xf32>
    %14 = arith.mulf %12, %13 : vector<1x1xf32>
    %c0_8 = arith.constant 0 : index
    %c0_9 = arith.constant 0 : index
    %15 = vector.load %arg3[%c0_8, %c0_9] : memref<1x1xf32, #tpu.memory_space<vmem>>, vector<1x1xf32>
    tpu.vector_store %arg3[%c0_8, %c0_9], %14 {strides = array<i32>} : memref<1x1xf32, #tpu.memory_space<vmem>>, vector<1x1xf32>,
    return
  }
}

</mosaic_0001>

<llo_original>
// kernel: tpu_custom_call.1
$region0: #{tpu_custom_call.1}
  #allocation0 [shape = 'u32[]', space=smem, size = 0x4, offset = 0x4, fixed_abs, tag = 'smem constant byte address 0x4 - core index']
  #allocation1 [shape = 'u32[144,128]{1,0:T(1,128)}', space=vmem, size = 0x12000, scoped, tag = 'internal scratch']
  %s0 = inlined_call_operand.hbm [shape: f32[8,256], index: 0, kind: input, shape index: {}]
  %s1 = inlined_call_operand.hbm [shape: f32[8,8], index: 1, kind: input, shape index: {}]
  %s2 = inlined_call_operand.hbm [shape: f32[8,8], index: 2, kind: output, shape index: {0}]
  %s3 = inlined_call_operand.hbm [shape: f32[1,1], index: 3, kind: output, shape index: {1}]
  %4 = xla_tuple %s2, %s3
  %s5 = sld [smem:[#allocation0]]
  $region34: #{tpu_custom_call.1} parent=0
    _
  %s7 = ssub.s32 1, %s5
  %s8 = scalar_select 0, %s7, %s5
  $region1: #{tpu_custom_call.1} parent=0
    #allocation2 [shape = 'u8[8192]{0}', space=vmem, size = 0x2000, scoped, tag = 'input window, operand 0, single buffered']
    #allocation3 [shape = 's32[1]{0}', space=sflag, size = 0x4, scoped, tag = 'scoped memory for tpu_custom_call.1']
    #allocation4 [shape = 's32[1]{0}', space=sflag, size = 0x4, scoped, tag = 'scoped memory for tpu_custom_call.1']
    #allocation5 [shape = 'u8[4096]{0}', space=vmem, size = 0x1000, scoped, tag = 'input window, operand 1, single buffered']
    #allocation6 [shape = 's32[1]{0}', space=sflag, size = 0x4, scoped, tag = 'scoped memory for tpu_custom_call.1']
    #allocation7 [shape = 'u8[4096]{0}', space=vmem, size = 0x1000, scoped, tag = 'output window, operand 0, single buffered']
    #allocation8 [shape = 'u8[512]{0}', space=vmem, size = 0x400, scoped, tag = 'output window, operand 1, single buffered']
    #allocation9 [shape = 's32[1]{0}', space=sflag, size = 0x4, scoped, tag = 'scoped memory for tpu_custom_call.1']
    %9 = vsyncpa [#allocation3], 0
    %10 = vsyncpa [#allocation6], 0
    %11 = vsyncpa [#allocation4], 0
    %12 = vsyncpa [#allocation9], 0
    // Predicated region
    $region2: #{tpu_custom_call.1} parent=1 // pred_check
      _
    $region3: #{tpu_custom_call.1} parent=1 // pred_check_branch
      %14 = sbr.rel (0) target = $region5
    $region4: #{tpu_custom_call.1} parent=1 // pred_region
      %s16 = ssub.s32 256, 256
      %17 = vsyncadd [#allocation3], %s16
      %s19 = sshll.u32 [#allocation2], 4
      %s20 = int_to_ptr.vmem [resolvable:$true] %s19
      %22 = dma.hbm_to_vmem [thread:$0]  %s0, 256, %s20, [#allocation3]
    $region5: #{tpu_custom_call.1} parent=1 // pred_fallthru
      _
    // Predicated region
    $region6: #{tpu_custom_call.1} parent=1 // pred_check
      _
    $region7: #{tpu_custom_call.1} parent=1 // pred_check_branch
      %24 = sbr.rel (0) target = $region9
    $region8: #{tpu_custom_call.1} parent=1 // pred_region
      %s26 = ssub.s32 128, 128
      %27 = vsyncadd [#allocation6], %s26
      %s29 = sshll.u32 [#allocation5], 4
      %s30 = int_to_ptr.vmem [resolvable:$true] %s29
      %32 = dma.hbm_to_vmem [thread:$0]  %s1, 128, %s30, [#allocation6]
    $region9: #{tpu_custom_call.1} parent=1 // pred_fallthru
      _
    // Predicated region
    $region10: #{tpu_custom_call.1} parent=1 // pred_check
      _
    $region11: #{tpu_custom_call.1} parent=1 // pred_check_branch
      %34 = sbr.rel (0) target = $region13
    $region12: #{tpu_custom_call.1} parent=1 // pred_region
      %35 = dma.done [#allocation3], 256
    $region13: #{tpu_custom_call.1} parent=1 // pred_fallthru
      _
    // Predicated region
    $region14: #{tpu_custom_call.1} parent=1 // pred_check
      _
    $region15: #{tpu_custom_call.1} parent=1 // pred_check_branch
      %37 = sbr.rel (0) target = $region17
    $region16: #{tpu_custom_call.1} parent=1 // pred_region
      %38 = dma.done [#allocation6], 128
    $region17: #{tpu_custom_call.1} parent=1 // pred_fallthru
      _
    %v39 = vld [vmem:[#allocation2] sm:$0xff]
    %v40 = vld [vmem:[#allocation2 + $0x8] sm:$0xff]
    %41 = vmatprep.subr.mxu0 %v40
    %42 = vmatpush1.xpose.msra.mxu0 %v39
    %43 = vmatprep.subr.mxu0 0.0
    %44 = vmatpush1.xpose.msra.mxu0 0.0
    %45 = vmatprep.subr.mxu0 0.0
    %46 = vmatpush1.xpose.msra.mxu0 0.0
    %47 = vmatprep.subr.mxu0 0.0
    %48 = vmatpush1.xpose.msra.mxu0 0.0
    %49 = vmatprep.subr.mxu0 0.0
    %50 = vmatpush1.xpose.msra.mxu0 0.0
    %51 = vmatprep.subr.mxu0 0.0
    %52 = vmatpush1.xpose.msra.mxu0 0.0
    %53 = vmatprep.subr.mxu0 0.0
    %54 = vmatpush1.xpose.msra.mxu0 0.0
    %55 = vmatprep.subr.mxu0 0.0
    %56 = vmatpush1.xpose.msra.mxu0 0.0
    %57 = vmatprep.subr.mxu0 0.0
    %58 = vmatpush1.xpose.msra.mxu0 0.0
    %59 = vmatprep.subr.mxu0 0.0
    %60 = vmatpush1.xpose.msra.mxu0 0.0
    %61 = vmatprep.subr.mxu0 0.0
    %62 = vmatpush1.xpose.msra.mxu0 0.0
    %63 = vmatprep.subr.mxu0 0.0
    %64 = vmatpush1.xpose.msra.mxu0 0.0
    %65 = vmatprep.subr.mxu0 0.0
    %66 = vmatpush1.xpose.msra.mxu0 0.0
    %67 = vmatprep.subr.mxu0 0.0
    %68 = vmatpush1.xpose.msra.mxu0 0.0
    %69 = vmatprep.subr.mxu0 0.0
    %70 = vmatpush1.xpose.msra.mxu0 0.0
    %71 = vmatprep.subr.mxu0 0.0
    %72 = vmatpush1.xpose.msra.mxu0 0.0
    %73 = vmatprep.subr.mxu0 0.0
    %74 = vmatpush1.xpose.msra.mxu0 0.0
    %75 = vmatprep.subr.mxu0 0.0
    %76 = vmatpush1.xpose.msra.mxu0 0.0
    %77 = vmatprep.subr.mxu0 0.0
    %78 = vmatpush1.xpose.msra.mxu0 0.0
    %79 = vmatprep.subr.mxu0 0.0
    %80 = vmatpush1.xpose.msra.mxu0 0.0
    %81 = vmatprep.subr.mxu0 0.0
    %82 = vmatpush1.xpose.msra.mxu0 0.0
    %83 = vmatprep.subr.mxu0 0.0
    %84 = vmatpush1.xpose.msra.mxu0 0.0
    %85 = vmatprep.subr.mxu0 0.0
    %86 = vmatpush1.xpose.msra.mxu0 0.0
    %87 = vmatprep.subr.mxu0 0.0
    %88 = vmatpush1.xpose.msra.mxu0 0.0
    %89 = vmatprep.subr.mxu0 0.0
    %90 = vmatpush1.xpose.msra.mxu0 0.0
    %91 = vmatprep.subr.mxu0 0.0
    %92 = vmatpush1.xpose.msra.mxu0 0.0
    %93 = vmatprep.subr.mxu0 0.0
    %94 = vmatpush1.xpose.msra.mxu0 0.0
    %95 = vmatprep.subr.mxu0 0.0
    %96 = vmatpush1.xpose.msra.mxu0 0.0
    %97 = vmatprep.subr.mxu0 0.0
    %98 = vmatpush1.xpose.msra.mxu0 0.0
    %99 = vmatprep.subr.mxu0 0.0
    %100 = vmatpush1.xpose.msra.mxu0 0.0
    %101 = vmatprep.subr.mxu0 0.0
    %102 = vmatpush1.xpose.msra.mxu0 0.0
    %103 = vmatprep.subr.mxu0 0.0
    %104 = vmatpush1.xpose.msra.mxu0 0.0
    %105 = vmatprep.mubr.f32.mxu0 %v40
    %106 = vmatmul.mubr.f32.gmra.mrb[0].mxu0 %v39
    %v107 = vpop.f32.mrb[0].mxu0
    %v108 = vadd.f32 0.0, %v107
    %v109 = vpop.f32.mrb[0].mxu0
    %110 = vdwg.mxu0
    %v111 = vmul.f32 %v108, 0.48828125
    %vm112 = vcmask 64512
    %113 = vst.msk [vmem:[#allocation7] sm:$0xff] %vm112, %v111
    %v114 = vld [vmem:[#allocation5] sm:$0xff]
    %v115 = vsub.f32 %v111, %v114
    %v116 = vmul.f32 %v115, %v115
    %v117 = vsel %vm112, %v116, 0.0
    %118 = vadd.xlane.f32.xlu0 %v117
    %v119 = vpop.xlane.xlu0 %118
    %v120 = vrot.slane %v119, 4
    %v121 = vadd.f32 %v119, %v120
    %v122 = vrot.slane %v121, 2
    %v123 = vadd.f32 %v121, %v122
    %v124 = vrot.slane %v123, 1
    %v125 = vadd.f32 %v123, %v124
    %s126 = vtos %v125
    %v127 = vstv %s126
    %v128 = vmul.f32 %v127, 0.015625
    %vm129 = vcmask 0
    %130 = vst.msk [vmem:[#allocation8] sm:$0x1] %vm129, %v128
    // Predicated region
    $region18: #{tpu_custom_call.1} parent=1 // pred_check
      _
    $region19: #{tpu_custom_call.1} parent=1 // pred_check_branch
      %132 = sbr.rel (0) target = $region21
    $region20: #{tpu_custom_call.1} parent=1 // pred_region
      %s134 = ssub.s32 128, 128
      %135 = vsyncadd [#allocation4], %s134
      %s137 = sshll.u32 [#allocation7], 4
      %s138 = int_to_ptr.vmem [resolvable:$true] %s137
      %140 = dma.vmem_to_hbm [thread:$0]  %s138, 128, %s2, [#allocation4]
    $region21: #{tpu_custom_call.1} parent=1 // pred_fallthru
      _
    // Predicated region
    $region22: #{tpu_custom_call.1} parent=1 // pred_check
      _
    $region23: #{tpu_custom_call.1} parent=1 // pred_check_branch
      %142 = sbr.rel (0) target = $region25
    $region24: #{tpu_custom_call.1} parent=1 // pred_region
      %s144 = ssub.s32 16, 16
      %145 = vsyncadd [#allocation9], %s144
      %s147 = sshll.u32 [#allocation8], 4
      %s148 = int_to_ptr.vmem [resolvable:$true] %s147
      %150 = dma.vmem_to_hbm [thread:$0]  %s148, 16, %s3, [#allocation9]
    $region25: #{tpu_custom_call.1} parent=1 // pred_fallthru
      _
    // Predicated region
    $region26: #{tpu_custom_call.1} parent=1 // pred_check
      _
    $region27: #{tpu_custom_call.1} parent=1 // pred_check_branch
      %152 = sbr.rel (0) target = $region29
    $region28: #{tpu_custom_call.1} parent=1 // pred_region
      %153 = dma.done [#allocation4], 128
    $region29: #{tpu_custom_call.1} parent=1 // pred_fallthru
      _
    // Predicated region
    $region30: #{tpu_custom_call.1} parent=1 // pred_check
      _
    $region31: #{tpu_custom_call.1} parent=1 // pred_check_branch
      %155 = sbr.rel (0) target = $region33
    $region32: #{tpu_custom_call.1} parent=1 // pred_region
      %156 = dma.done [#allocation9], 16
    $region33: #{tpu_custom_call.1} parent=1 // pred_fallthru
      _
    %157 = vsyncpa [#allocation3], 1
    %158 = vsyncpa [#allocation6], 1
    %159 = vsyncpa [#allocation4], 1
    %160 = vsyncpa [#allocation9], 1

</llo_original>
